<compile_context>
chip_gen: v6e
topology: v6e:2x2x1
jax: 0.10.0
libtpu: 0.0.40
codegen_flags: <defaults>
</compile_context>

<pallas_src>
import functools

import jax
import jax.numpy as jnp
from jax.experimental import pallas as pl
from jax.experimental.pallas import tpu as pltpu


def _rpad8(n):
    return ((n + 7) // 8) * 8


# --------------------------------------------------------------------------------------
# Kernel
# --------------------------------------------------------------------------------------
def _feature_attention_kernel(x_ref, w_ref, b_ref, m_ref, out_ref, *, hdim, ksize, n_len):
    ci, cols = x_ref.shape             # lane-dense (Ci_pad, bt*T*N)
    co = out_ref.shape[0]
    pad = (ksize - 1) // 2

    def wmat(i, r, c):                 # packed weights, zero-padded to (rmax, cmax)
        return w_ref[i][:r, :c]

    def bcol(i, r):                    # packed biases as (rows, 1) columns
        return b_ref[i][:r, :]

    x2 = x_ref[...].astype(jnp.float32)                                # (Ci, cols)

    # ---- 1x1 conv (nconv): (Co, Ci) @ (Ci, cols) -> lane-dense (Co, cols) -----------
    y = jnp.dot(wmat(0, co, ci), x2,
                preferred_element_type=jnp.float32) + bcol(0, co)

    # ---- channel attention MLP (per position, exactly as in the PyTorch module) -----
    h = jnp.maximum(
        jnp.dot(wmat(1, hdim, co), y, preferred_element_type=jnp.float32)
        + bcol(1, hdim), 0.0)
    ca = (jnp.dot(wmat(2, co, hdim), h, preferred_element_type=jnp.float32)
          + bcol(2, co))
    yg = y * ca                                                        # (Co, cols)

    # ---- hoisted per-tap validity masks (precomputed on host, shared by both convs) -
    tap_mask = [None] * ksize
    j = 0
    for k in range(ksize):
        if k - pad != 0:
            tap_mask[k] = m_ref[j:j + 1, :]                            # (1, cols) in {0,1}
            j += 1

    def im2col(v):
        # v: (rows, cols) -> (K*rows, cols).  Tap k reads time t + (k - pad) via a lane
        # roll of (k - pad)*N plus the precomputed boundary mask (covers both zero
        # padding and batch edges).  Row order k*rows + r matches the packed weights.
        taps = []
        for k in range(ksize):
            d = k - pad
            if d == 0:
                taps.append(v)
            else:
                shifted = pltpu.roll(v, shift=(-d * n_len) % cols, axis=1)
                taps.append(shifted * tap_mask[k])
        return jnp.concatenate(taps, axis=0)

    # ---- spatial attention: [conv(1,K)+BN] -> ReLU -> [conv(1,K)+BN] -> sigmoid -----
    # (eval-mode BN already folded into the packed conv weights / biases.)
    z = jnp.maximum(
        jnp.dot(wmat(3, hdim, ksize * co), im2col(yg),
                preferred_element_type=jnp.float32) + bcol(3, hdim), 0.0)
    s = (jnp.dot(wmat(4, co, ksize * hdim), im2col(z),
                 preferred_element_type=jnp.float32) + bcol(4, co))
    att = 0.5 * jnp.tanh(0.5 * s) + 0.5        # == sigmoid(s); tanh runs on the EUP slot

    out_ref[...] = (yg * att).astype(out_ref.dtype)                    # lane-dense store


# --------------------------------------------------------------------------------------
# Parameters (torch-style layouts) and eval-mode BN folding
# --------------------------------------------------------------------------------------
# TODO(synk): training-mode BatchNorm (batch statistics + running-stat updates) is not
# implemented; eval-mode running stats are folded into the conv weights instead.
def _bn_fold(gamma, beta, mean, var, eps=1e-5):
    scale = gamma / jnp.sqrt(var + eps)
    return scale, beta - mean * scale


def init_params(key, input_dim, output_dim, kernel_size=5, rate=4):
    hid = output_dim // rate
    ks = jax.random.split(key, 14)
    s = 0.1
    f32 = jnp.float32
    return {
        # torch layouts: Conv2d weight (O, I, kH, kW); Linear weight (out, in)
        "nconv_w": jax.random.normal(ks[0], (output_dim, input_dim, 1, 1), f32) * s,
        "nconv_b": jax.random.normal(ks[1], (output_dim,), f32) * s,
        "ca1_w": jax.random.normal(ks[2], (hid, output_dim), f32) * s,
        "ca1_b": jax.random.normal(ks[3], (hid,), f32) * s,
        "ca2_w": jax.random.normal(ks[4], (output_dim, hid), f32) * s,
        "ca2_b": jax.random.normal(ks[5], (output_dim,), f32) * s,
        "sp1_w": jax.random.normal(ks[6], (hid, output_dim, 1, kernel_size), f32) * s,
        "sp1_b": jax.random.normal(ks[7], (hid,), f32) * s,
        "sp2_w": jax.random.normal(ks[8], (output_dim, hid, 1, kernel_size), f32) * s,
        "sp2_b": jax.random.normal(ks[9], (output_dim,), f32) * s,
        # BatchNorm2d eval-mode affine + running stats (non-trivial, so folding is tested)
        "bn1_gamma": 1.0 + 0.1 * jax.random.normal(ks[10], (hid,), f32),
        "bn1_beta": 0.1 * jax.random.normal(ks[11], (hid,), f32),
        "bn1_mean": 0.05 * jax.random.normal(ks[10], (hid,), f32),
        "bn1_var": 1.0 + 0.2 * jax.random.uniform(ks[11], (hid,), f32),
        "bn2_gamma": 1.0 + 0.1 * jax.random.normal(ks[12], (output_dim,), f32),
        "bn2_beta": 0.1 * jax.random.normal(ks[13], (output_dim,), f32),
        "bn2_mean": 0.05 * jax.random.normal(ks[12], (output_dim,), f32),
        "bn2_var": 1.0 + 0.2 * jax.random.uniform(ks[13], (output_dim,), f32),
    }


# --------------------------------------------------------------------------------------
# Wrapper
# --------------------------------------------------------------------------------------
def feature_attention_forward(x, params, *, channels_first_output=False):
    """x: (B, T, N, C_in) -- same axis order the PyTorch forward receives.
    Returns (B, T, N, C_out); with channels_first_output=True returns the lane-dense
    (C_out, B*T*N) result directly (no HBM relayout)."""
    B, T, N, Ci = x.shape
    Co = params["nconv_w"].shape[0]
    H = params["ca1_w"].shape[0]
    K = params["sp1_w"].shape[-1]
    pad = (K - 1) // 2
    f32 = jnp.float32

    Hp = _rpad8(H)            # sublane-aligned hidden dim (extra zero rows are free)
    Cip = _rpad8(Ci)          # sublane-aligned input channels

    # ---- host-side prep (tiny): fold eval-mode BN into the 1xK convs; lay every
    # weight out as (out_ch, flattened_in) matching the kernel's im2col row order -----
    def pad2(a, r, c):
        return jnp.pad(a.astype(f32), ((0, r - a.shape[0]), (0, c - a.shape[1])))

    s1, t1 = _bn_fold(params["bn1_gamma"], params["bn1_beta"],
                      params["bn1_mean"], params["bn1_var"])
    s2, t2 = _bn_fold(params["bn2_gamma"], params["bn2_beta"],
                      params["bn2_mean"], params["bn2_var"])

    wn = pad2(params["nconv_w"][:, :, 0, 0], Co, Cip)                     # (Co, Cip)
    wca1 = pad2(params["ca1_w"], Hp, Co)                                  # (Hp, Co)
    wca2 = pad2(params["ca2_w"], Co, Hp)                                  # (Co, Hp)
    # im2col rows are ordered k*rows + r  ->  (O, I, K) -> (O, K, I) -> (O, K*I)
    ws1 = pad2(jnp.transpose(params["sp1_w"][:, :, 0, :], (0, 2, 1)).reshape(H, K * Co)
               * s1[:, None], Hp, K * Co)                                 # (Hp, K*Co)
    ws2 = (jnp.pad(jnp.transpose(params["sp2_w"][:, :, 0, :], (0, 2, 1)),
                   ((0, 0), (0, 0), (0, Hp - H)))
           .reshape(Co, K * Hp) * s2[:, None])                            # (Co, K*Hp)

    bn_b = params["nconv_b"]
    bca1 = jnp.pad(params["ca1_b"], (0, Hp - H))
    bca2 = params["ca2_b"]
    bs1 = jnp.pad(params["sp1_b"] * s1 + t1, (0, Hp - H))
    bs2 = params["sp2_b"] * s2 + t2

    mats = (wn, wca1, wca2, ws1, ws2)
    vecs = (bn_b, bca1, bca2, bs1, bs2)
    rmax = max(a.shape[0] for a in mats)
    cmax = max(a.shape[1] for a in mats)
    w_pack = jnp.stack([pad2(a, rmax, cmax) for a in mats])               # (5, rmax, cmax)
    b_pack = jnp.stack([jnp.pad(v.astype(f32), (0, rmax - v.shape[0]))
                        for v in vecs])[..., None]                        # (5, rmax, 1)

    # ---- lane-dense, channels-first input: (Ci_pad, B*T*N) --------------------------
    x_t = jnp.transpose(
        jnp.pad(x.reshape(B * T * N, Ci), ((0, 0), (0, Cip - Ci))))       # (Cip, cols)

    # ---- VMEM budget: counts padded sublane layouts, materialized im2col buffers and
    # double-buffered I/O blocks; limits derived per-generation from get_tpu_info -----
    try:
        vmem_cap = int(pltpu.get_tpu_info().vmem_capacity_bytes)
    except Exception:
        vmem_cap = 64 * 1024 * 1024                                       # v7x-safe fallback
    vmem_limit = min(int(vmem_cap * 0.6), 64 * 1024 * 1024)
    budget = vmem_limit // 2

    mrows = max(K - 1, 1)
    bytes_per_col = 4 * (2 * Cip                  # x block (double-buffered)
                         + 2 * _rpad8(Co)         # out block (double-buffered)
                         + 2 * _rpad8(mrows)      # mask block (double-buffered)
                         + 4 * _rpad8(Co)         # y, ca, yg, s/att
                         + 2 * Hp                 # h, z
                         + _rpad8(K * Co)         # im2col(yg)
                         + _rpad8(K * Hp))        # im2col(z)
    bytes_per_col = int(bytes_per_col * 1.5)      # slack for compiler temporaries
    fixed_bytes = 4 * 5 * rmax * (cmax + 1) + (1 << 20)

    # ---- batch tiling: >1 grid steps when possible (pipelining + v7x megacore),
    # biggest block that still leaves enough steps, safe fallback to the smallest
    # aligned tile when nothing fits the budget ---------------------------------------
    per_batch_cols = T * N
    divs = [d for d in range(1, B + 1) if B % d == 0]
    aligned = [d for d in divs if (d * per_batch_cols) % 128 == 0 or d == B]
    feasible = [d for d in aligned
                if d * per_batch_cols * bytes_per_col + fixed_bytes <= budget]
    if not feasible:
        bt = min(aligned)
    else:
        big = [d for d in feasible if B // d >= 4 and d * per_batch_cols >= 2048]
        two = [d for d in feasible if B // d >= 2]
        bt = max(big) if big else (max(two) if two else max(feasible))
    cols_b = bt * per_batch_cols

    # ---- precomputed per-tap validity masks (identical pattern for every block) -----
    t_row = (jnp.arange(cols_b, dtype=jnp.int32) // N) % T
    rows = [((t_row + (k - pad) >= 0) & (t_row + (k - pad) < T)).astype(f32)
            for k in range(K) if k != pad]
    mask = jnp.stack(rows) if rows else jnp.ones((1, cols_b), f32)         # (mrows, cols_b)

    kernel = functools.partial(_feature_attention_kernel, hdim=Hp, ksize=K, n_len=N)
    out_flat = pl.pallas_call(
        kernel,
        out_shape=jax.ShapeDtypeStruct((Co, B * T * N), x.dtype),
        grid=(B // bt,),
        in_specs=[
            pl.BlockSpec((Cip, cols_b), lambda i: (0, i)),        # mirrors out_specs
            pl.BlockSpec(w_pack.shape, lambda i: (0, 0, 0)),
            pl.BlockSpec(b_pack.shape, lambda i: (0, 0, 0)),
            pl.BlockSpec(mask.shape, lambda i: (0, 0)),
        ],
        out_specs=pl.BlockSpec((Co, cols_b), lambda i: (0, i)),   # lane-dense store
        compiler_params=pltpu.CompilerParams(
            dimension_semantics=("parallel",),
            vmem_limit_bytes=vmem_limit),
    )(x_t, w_pack, b_pack, mask)

    if channels_first_output:
        return out_flat                                           # (Co, B*T*N), no relayout
    # single cheap relayout back to the PyTorch output layout (B, T, N, Co)
    return jnp.transpose(out_flat.reshape(Co, B, T, N), (1, 2, 3, 0))


# --------------------------------------------------------------------------------------
# Pure-JAX reference (mirrors the PyTorch module, eval-mode BatchNorm)
# --------------------------------------------------------------------------------------
def feature_attention_reference(x, params, eps=1e-5):
    xc = jnp.transpose(x, (0, 3, 2, 1))                                   # (B, Ci, N, T)
    y = jax.lax.conv_general_dilated(
        xc, params["nconv_w"], (1, 1), "VALID",
        dimension_numbers=("NCHW", "OIHW", "NCHW"))
    y = y + params["nconv_b"][None, :, None, None]                        # (B, Co, N, T)

    yp = jnp.transpose(y, (0, 2, 3, 1))                                   # (B, N, T, Co)
    h = jax.nn.relu(yp @ params["ca1_w"].T + params["ca1_b"])
    ca = h @ params["ca2_w"].T + params["ca2_b"]
    y = y * jnp.transpose(ca, (0, 3, 1, 2))                               # channel gating

    def conv_bn(v, w, b, gamma, beta, mean, var):
        p = (w.shape[-1] - 1) // 2
        o = jax.lax.conv_general_dilated(
            v, w, (1, 1), ((0, 0), (p, p)),
            dimension_numbers=("NCHW", "OIHW", "NCHW"))
        o = o + b[None, :, None, None]
        scale = gamma / jnp.sqrt(var + eps)
        shift = beta - mean * scale
        return o * scale[None, :, None, None] + shift[None, :, None, None]

    z = jax.nn.relu(conv_bn(y, params["sp1_w"], params["sp1_b"],
                            params["bn1_gamma"], params["bn1_beta"],
                            params["bn1_mean"], params["bn1_var"]))
    s = conv_bn(z, params["sp2_w"], params["sp2_b"],
                params["bn2_gamma"], params["bn2_beta"],
                params["bn2_mean"], params["bn2_var"])
    out = y * jax.nn.sigmoid(s)
    return jnp.transpose(out, (0, 3, 2, 1))                               # (B, T, N, Co)


if __name__ == "__main__":
    B, T, N, Ci = 2, 16, 8, 4          # input x: (B, T, N, C_in)
    Co, K, rate = 16, 5, 4             # output_dim=16, kernel_size=5, rate=4

    key = jax.random.PRNGKey(0)
    kx, kp = jax.random.split(key)
    x = jax.random.normal(kx, (B, T, N, Ci), jnp.float32)
    params = init_params(kp, Ci, Co, kernel_size=K, rate=rate)

    out = jax.jit(feature_attention_forward)(x, params)
    jax.block_until_ready(out)
    assert out.shape == (B, T, N, Co), out.shape

    ref = feature_attention_reference(x, params)
    err = float(jnp.max(jnp.abs(out - ref)))
    assert err < 5e-3, f"kernel/reference mismatch: max abs err = {err}"
    print("KERNEL_OK")
</pallas_src>

<mosaic_0001>
module attributes {stable_mosaic.version = 11 : i64} {
  func.func @_feature_attention_kernel(%arg0: i32, %arg1: memref<8x128xf32, #tpu.memory_space<vmem>>, %arg2: memref<5x16x80xf32, #tpu.memory_space<vmem>>, %arg3: memref<5x16x1xf32, #tpu.memory_space<vmem>>, %arg4: memref<4x128xf32, #tpu.memory_space<vmem>>, %arg5: memref<16x128xf32, #tpu.memory_space<vmem>>) attributes {dimension_semantics = [#tpu.dimension_semantics<parallel>], iteration_bounds = array<i64: 2>, scalar_prefetch = 0 : i64, scratch_operands = 0 : i64, tpu.core_type = #tpu.core_type<tc>, window_params = [{transform_indices = @transform_0, window_bounds = array<i64: 8, 128>}, {pipeline_mode = #tpu.pipeline_mode<synchronous>, transform_indices = @transform_1, window_bounds = array<i64: 5, 16, 80>}, {pipeline_mode = #tpu.pipeline_mode<synchronous>, transform_indices = @transform_2, window_bounds = array<i64: 5, 16, 1>}, {pipeline_mode = #tpu.pipeline_mode<synchronous>, transform_indices = @transform_3, window_bounds = array<i64: 4, 128>}, {transform_indices = @transform_4, window_bounds = array<i64: 16, 128>}]} {
    %c0 = arith.constant 0 : index
    %c0_0 = arith.constant 0 : index
    %0 = vector.load %arg1[%c0, %c0_0] : memref<8x128xf32, #tpu.memory_space<vmem>>, vector<8x128xf32>
    %c0_1 = arith.constant 0 : index
    %c0_2 = arith.constant 0 : index
    %c0_3 = arith.constant 0 : index
    %1 = vector.load %arg2[%c0_1, %c0_2, %c0_3] : memref<5x16x80xf32, #tpu.memory_space<vmem>>, vector<1x16x80xf32>
    %2 = vector.shape_cast %1 : vector<1x16x80xf32> to vector<16x80xf32>
    %3 = vector.extract_strided_slice %2 {offsets = [0, 0], sizes = [16, 8], strides = [1, 1]} : vector<16x80xf32> to vector<16x8xf32>
    %cst = arith.constant dense<0.000000e+00> : vector<16x128xf32>
    %4 = tpu.matmul %3, %0, %cst {dimension_numbers = #tpu.dot_dimension_numbers<[1], [0], [0], [1], [0, 0, 1, 1], [], []>} : vector<16x8xf32>, vector<8x128xf32>, vector<16x128xf32> -> vector<16x128xf32>
    %c0_4 = arith.constant 0 : index
    %c0_5 = arith.constant 0 : index
    %c0_6 = arith.constant 0 : index
    %5 = vector.load %arg3[%c0_4, %c0_5, %c0_6] : memref<5x16x1xf32, #tpu.memory_space<vmem>>, vector<1x16x1xf32>
    %6 = vector.shape_cast %5 : vector<1x16x1xf32> to vector<16x1xf32>
    %7 = vector.broadcast %6 : vector<16x1xf32> to vector<16x128xf32>
    %8 = arith.addf %4, %7 : vector<16x128xf32>
    %c1 = arith.constant 1 : index
    %c0_7 = arith.constant 0 : index
    %c0_8 = arith.constant 0 : index
    %9 = vector.load %arg2[%c1, %c0_7, %c0_8] : memref<5x16x80xf32, #tpu.memory_space<vmem>>, vector<1x16x80xf32>
    %10 = vector.shape_cast %9 : vector<1x16x80xf32> to vector<16x80xf32>
    %11 = vector.extract_strided_slice %10 {offsets = [0, 0], sizes = [8, 16], strides = [1, 1]} : vector<16x80xf32> to vector<8x16xf32>
    %cst_9 = arith.constant dense<0.000000e+00> : vector<8x128xf32>
    %12 = tpu.matmul %11, %8, %cst_9 {dimension_numbers = #tpu.dot_dimension_numbers<[1], [0], [0], [1], [0, 0, 1, 1], [], []>} : vector<8x16xf32>, vector<16x128xf32>, vector<8x128xf32> -> vector<8x128xf32>
    %c1_10 = arith.constant 1 : index
    %c0_11 = arith.constant 0 : index
    %c0_12 = arith.constant 0 : index
    %13 = vector.load %arg3[%c1_10, %c0_11, %c0_12] : memref<5x16x1xf32, #tpu.memory_space<vmem>>, vector<1x16x1xf32>
    %14 = vector.shape_cast %13 : vector<1x16x1xf32> to vector<16x1xf32>
    %15 = vector.extract_strided_slice %14 {offsets = [0, 0], sizes = [8, 1], strides = [1, 1]} : vector<16x1xf32> to vector<8x1xf32>
    %16 = vector.broadcast %15 : vector<8x1xf32> to vector<8x128xf32>
    %17 = arith.addf %12, %16 : vector<8x128xf32>
    %cst_13 = arith.constant 0.000000e+00 : f32
    %18 = vector.broadcast %cst_13 : f32 to vector<8x128xf32>
    %19 = arith.maximumf %17, %18 : vector<8x128xf32>
    %c2 = arith.constant 2 : index
    %c0_14 = arith.constant 0 : index
    %c0_15 = arith.constant 0 : index
    %20 = vector.load %arg2[%c2, %c0_14, %c0_15] : memref<5x16x80xf32, #tpu.memory_space<vmem>>, vector<1x16x80xf32>
    %21 = vector.shape_cast %20 : vector<1x16x80xf32> to vector<16x80xf32>
    %22 = vector.extract_strided_slice %21 {offsets = [0, 0], sizes = [16, 8], strides = [1, 1]} : vector<16x80xf32> to vector<16x8xf32>
    %cst_16 = arith.constant dense<0.000000e+00> : vector<16x128xf32>
    %23 = tpu.matmul %22, %19, %cst_16 {dimension_numbers = #tpu.dot_dimension_numbers<[1], [0], [0], [1], [0, 0, 1, 1], [], []>} : vector<16x8xf32>, vector<8x128xf32>, vector<16x128xf32> -> vector<16x128xf32>
    %c2_17 = arith.constant 2 : index
    %c0_18 = arith.constant 0 : index
    %c0_19 = arith.constant 0 : index
    %24 = vector.load %arg3[%c2_17, %c0_18, %c0_19] : memref<5x16x1xf32, #tpu.memory_space<vmem>>, vector<1x16x1xf32>
    %25 = vector.shape_cast %24 : vector<1x16x1xf32> to vector<16x1xf32>
    %26 = vector.broadcast %25 : vector<16x1xf32> to vector<16x128xf32>
    %27 = arith.addf %23, %26 : vector<16x128xf32>
    %28 = arith.mulf %8, %27 : vector<16x128xf32>
    %c0_20 = arith.constant 0 : index
    %c0_21 = arith.constant 0 : index
    %29 = vector.load %arg4[%c0_20, %c0_21] : memref<4x128xf32, #tpu.memory_space<vmem>>, vector<1x128xf32>
    %c1_22 = arith.constant 1 : index
    %c0_23 = arith.constant 0 : index
    %30 = vector.load %arg4[%c1_22, %c0_23] : memref<4x128xf32, #tpu.memory_space<vmem>>, vector<1x128xf32>
    %c2_24 = arith.constant 2 : index
    %c0_25 = arith.constant 0 : index
    %31 = vector.load %arg4[%c2_24, %c0_25] : memref<4x128xf32, #tpu.memory_space<vmem>>, vector<1x128xf32>
    %c3 = arith.constant 3 : index
    %c0_26 = arith.constant 0 : index
    %32 = vector.load %arg4[%c3, %c0_26] : memref<4x128xf32, #tpu.memory_space<vmem>>, vector<1x128xf32>
    %c3_27 = arith.constant 3 : index
    %c0_28 = arith.constant 0 : index
    %c0_29 = arith.constant 0 : index
    %33 = vector.load %arg2[%c3_27, %c0_28, %c0_29] : memref<5x16x80xf32, #tpu.memory_space<vmem>>, vector<1x16x80xf32>
    %34 = vector.shape_cast %33 : vector<1x16x80xf32> to vector<16x80xf32>
    %35 = vector.extract_strided_slice %34 {offsets = [0, 0], sizes = [8, 80], strides = [1, 1]} : vector<16x80xf32> to vector<8x80xf32>
    %c16_i32 = arith.constant 16 : i32
    %36 = tpu.dynamic_rotate %28 by %c16_i32 dim 1 : vector<16x128xf32>, i32 -> vector<16x128xf32>
    %37 = vector.broadcast %29 : vector<1x128xf32> to vector<16x128xf32>
    %38 = arith.mulf %36, %37 : vector<16x128xf32>
    %c8_i32 = arith.constant 8 : i32
    %39 = tpu.dynamic_rotate %28 by %c8_i32 dim 1 : vector<16x128xf32>, i32 -> vector<16x128xf32>
    %40 = vector.broadcast %30 : vector<1x128xf32> to vector<16x128xf32>
    %41 = arith.mulf %39, %40 : vector<16x128xf32>
    %c120_i32 = arith.constant 120 : i32
    %42 = tpu.dynamic_rotate %28 by %c120_i32 dim 1 : vector<16x128xf32>, i32 -> vector<16x128xf32>
    %43 = vector.broadcast %31 : vector<1x128xf32> to vector<16x128xf32>
    %44 = arith.mulf %42, %43 : vector<16x128xf32>
    %c112_i32 = arith.constant 112 : i32
    %45 = tpu.dynamic_rotate %28 by %c112_i32 dim 1 : vector<16x128xf32>, i32 -> vector<16x128xf32>
    %46 = vector.broadcast %32 : vector<1x128xf32> to vector<16x128xf32>
    %47 = arith.mulf %45, %46 : vector<16x128xf32>
    %48 = tpu.concatenate %38, %41, %28, %44, %47 in 0 : vector<16x128xf32>, vector<16x128xf32>, vector<16x128xf32>, vector<16x128xf32>, vector<16x128xf32> -> vector<80x128xf32>
    %cst_30 = arith.constant dense<0.000000e+00> : vector<8x128xf32>
    %49 = tpu.matmul %35, %48, %cst_30 {dimension_numbers = #tpu.dot_dimension_numbers<[1], [0], [0], [1], [0, 0, 1, 1], [], []>} : vector<8x80xf32>, vector<80x128xf32>, vector<8x128xf32> -> vector<8x128xf32>
    %c3_31 = arith.constant 3 : index
    %c0_32 = arith.constant 0 : index
    %c0_33 = arith.constant 0 : index
    %50 = vector.load %arg3[%c3_31, %c0_32, %c0_33] : memref<5x16x1xf32, #tpu.memory_space<vmem>>, vector<1x16x1xf32>
    %51 = vector.shape_cast %50 : vector<1x16x1xf32> to vector<16x1xf32>
    %52 = vector.extract_strided_slice %51 {offsets = [0, 0], sizes = [8, 1], strides = [1, 1]} : vector<16x1xf32> to vector<8x1xf32>
    %53 = vector.broadcast %52 : vector<8x1xf32> to vector<8x128xf32>
    %54 = arith.addf %49, %53 : vector<8x128xf32>
    %cst_34 = arith.constant 0.000000e+00 : f32
    %55 = vector.broadcast %cst_34 : f32 to vector<8x128xf32>
    %56 = arith.maximumf %54, %55 : vector<8x128xf32>
    %c4 = arith.constant 4 : index
    %c0_35 = arith.constant 0 : index
    %c0_36 = arith.constant 0 : index
    %57 = vector.load %arg2[%c4, %c0_35, %c0_36] : memref<5x16x80xf32, #tpu.memory_space<vmem>>, vector<1x16x80xf32>
    %58 = vector.shape_cast %57 : vector<1x16x80xf32> to vector<16x80xf32>
    %59 = vector.extract_strided_slice %58 {offsets = [0, 0], sizes = [16, 40], strides = [1, 1]} : vector<16x80xf32> to vector<16x40xf32>
    %c16_i32_37 = arith.constant 16 : i32
    %60 = tpu.dynamic_rotate %56 by %c16_i32_37 dim 1 : vector<8x128xf32>, i32 -> vector<8x128xf32>
    %61 = vector.broadcast %29 : vector<1x128xf32> to vector<8x128xf32>
    %62 = arith.mulf %60, %61 : vector<8x128xf32>
    %c8_i32_38 = arith.constant 8 : i32
    %63 = tpu.dynamic_rotate %56 by %c8_i32_38 dim 1 : vector<8x128xf32>, i32 -> vector<8x128xf32>
    %64 = vector.broadcast %30 : vector<1x128xf32> to vector<8x128xf32>
    %65 = arith.mulf %63, %64 : vector<8x128xf32>
    %c120_i32_39 = arith.constant 120 : i32
    %66 = tpu.dynamic_rotate %56 by %c120_i32_39 dim 1 : vector<8x128xf32>, i32 -> vector<8x128xf32>
    %67 = vector.broadcast %31 : vector<1x128xf32> to vector<8x128xf32>
    %68 = arith.mulf %66, %67 : vector<8x128xf32>
    %c112_i32_40 = arith.constant 112 : i32
    %69 = tpu.dynamic_rotate %56 by %c112_i32_40 dim 1 : vector<8x128xf32>, i32 -> vector<8x128xf32>
    %70 = vector.broadcast %32 : vector<1x128xf32> to vector<8x128xf32>
    %71 = arith.mulf %69, %70 : vector<8x128xf32>
    %72 = tpu.concatenate %62, %65, %56, %68, %71 in 0 : vector<8x128xf32>, vector<8x128xf32>, vector<8x128xf32>, vector<8x128xf32>, vector<8x128xf32> -> vector<40x128xf32>
    %cst_41 = arith.constant dense<0.000000e+00> : vector<16x128xf32>
    %73 = tpu.matmul %59, %72, %cst_41 {dimension_numbers = #tpu.dot_dimension_numbers<[1], [0], [0], [1], [0, 0, 1, 1], [], []>} : vector<16x40xf32>, vector<40x128xf32>, vector<16x128xf32> -> vector<16x128xf32>
    %c4_42 = arith.constant 4 : index
    %c0_43 = arith.constant 0 : index
    %c0_44 = arith.constant 0 : index
    %74 = vector.load %arg3[%c4_42, %c0_43, %c0_44] : memref<5x16x1xf32, #tpu.memory_space<vmem>>, vector<1x16x1xf32>
    %75 = vector.shape_cast %74 : vector<1x16x1xf32> to vector<16x1xf32>
    %76 = vector.broadcast %75 : vector<16x1xf32> to vector<16x128xf32>
    %77 = arith.addf %73, %76 : vector<16x128xf32>
    %cst_45 = arith.constant 5.000000e-01 : f32
    %78 = vector.broadcast %cst_45 : f32 to vector<16x128xf32>
    %79 = arith.mulf %78, %77 : vector<16x128xf32>
    %80 = math.tanh %79 : vector<16x128xf32>
    %cst_46 = arith.constant 5.000000e-01 : f32
    %81 = vector.broadcast %cst_46 : f32 to vector<16x128xf32>
    %82 = arith.mulf %81, %80 : vector<16x128xf32>
    %cst_47 = arith.constant 5.000000e-01 : f32
    %83 = vector.broadcast %cst_47 : f32 to vector<16x128xf32>
    %84 = arith.addf %82, %83 : vector<16x128xf32>
    %85 = arith.mulf %28, %84 : vector<16x128xf32>
    %c0_48 = arith.constant 0 : index
    %c0_49 = arith.constant 0 : index
    %86 = vector.load %arg5[%c0_48, %c0_49] : memref<16x128xf32, #tpu.memory_space<vmem>>, vector<16x128xf32>
    tpu.vector_store %arg5[%c0_48, %c0_49], %85 {strides = array<i32>} : memref<16x128xf32, #tpu.memory_space<vmem>>, vector<16x128xf32>,
    return
  }
  func.func @transform_0(%arg0: i32) -> (i32, i32) {
    %c0_i32 = arith.constant 0 : i32
    %c0_i32_0 = arith.constant 0 : i32
    return %c0_i32, %arg0 : i32, i32
  }
  func.func @transform_1(%arg0: i32) -> (i32, i32, i32) {
    %c0_i32 = arith.constant 0 : i32
    %c0_i32_0 = arith.constant 0 : i32
    %c0_i32_1 = arith.constant 0 : i32
    %c0_i32_2 = arith.constant 0 : i32
    return %c0_i32, %c0_i32_0, %c0_i32_1 : i32, i32, i32
  }
  func.func @transform_2(%arg0: i32) -> (i32, i32, i32) {
    %c0_i32 = arith.constant 0 : i32
    %c0_i32_0 = arith.constant 0 : i32
    %c0_i32_1 = arith.constant 0 : i32
    %c0_i32_2 = arith.constant 0 : i32
    return %c0_i32, %c0_i32_0, %c0_i32_1 : i32, i32, i32
  }
  func.func @transform_3(%arg0: i32) -> (i32, i32) {
    %c0_i32 = arith.constant 0 : i32
    %c0_i32_0 = arith.constant 0 : i32
    %c0_i32_1 = arith.constant 0 : i32
    return %c0_i32, %c0_i32_0 : i32, i32
  }
  func.func @transform_4(%arg0: i32) -> (i32, i32) {
    %c0_i32 = arith.constant 0 : i32
    %c0_i32_0 = arith.constant 0 : i32
    return %c0_i32, %arg0 : i32, i32
  }
}

</mosaic_0001>

<llo_original>
// kernel: feature_attention_forward.1
$region0: #{feature_attention_forward.1}
  #allocation0 [shape = 'u32[]', space=smem, size = 0x4, offset = 0x4, fixed_abs, tag = 'smem constant byte address 0x4 - core index']
  #allocation1 [shape = 'u32[144,128]{1,0:T(1,128)}', space=vmem, size = 0x12000, scoped, tag = 'internal scratch']
  %s0 = inlined_call_operand.vmem [shape: f32[8,256], index: 0, kind: input, shape index: {}]
  %s1 = inlined_call_operand.vmem [shape: f32[5,16,80], index: 1, kind: input, shape index: {}]
  %s2 = inlined_call_operand.vmem [shape: f32[5,16,1], index: 2, kind: input, shape index: {}]
  %s3 = inlined_call_operand.vmem [shape: f32[4,128], index: 3, kind: input, shape index: {}]
  %s4 = inlined_call_operand.vmem [shape: f32[16,256], index: 4, kind: output, shape index: {}]
  %s5 = sld [smem:[#allocation0]]
  $region83: #{feature_attention_forward.1} parent=0
    _
  %s7 = ssub.s32 1, %s5
  %s8 = scalar_select 0, %s7, %s5
  $region1: #{feature_attention_forward.1} parent=0
    #allocation2 [shape = 'u8[16384]{0}', space=vmem, size = 0x4000, scoped, tag = 'output window, operand 0']
    loop: start=0, step=1, limit=4
    $region2: #{feature_attention_forward.1} parent=1 // loop_pre_header
      _
    $region3: #{feature_attention_forward.1} parent=1 // loop_header
      %s10 = sphi 0, %s14
      %p11 = scmp.ge.s32.totalorder %s10, 4
      %s20 = sphi 0, %s22
      %s23 = sphi 0, %s20
      %s24 = sphi 0, %s23
      %s40 = sphi 0, %s24
      %s44 = sphi 0, %s44
      %s46 = sphi 0, %s44
      %s47 = sphi 0, %s46
      %s61 = sphi 0, %s47
      %s65 = sphi 0, %s65
      %s67 = sphi 0, %s65
      %s68 = sphi 0, %s67
      %s82 = sphi 0, %s68
      %s86 = sphi 0, %s86
      %s88 = sphi 0, %s86
      %s89 = sphi 0, %s88
      %s103 = sphi 0, %s89
      %s109 = sphi 0, %s111
      %s112 = sphi 0, %s109
      %s113 = sphi 0, %s112
      %s129 = sphi 0, %s113
    $region4: #{feature_attention_forward.1} parent=1 // loop_header_branch
      %13 = sbr.rel (%p11) target = $region8
    $region5: #{feature_attention_forward.1} parent=1 // loop_body
      %s15 = ssub.s32 %s10, 1
      %s16 = ssub.s32 %s10, 2
      %s17 = sadd.s32 %s10, 1
      %s18 = ssub.s32 %s10, %s17
      %p19 = scmp.eq.s32.totalorder %s18, 0
      %s21 = sadd.s32 %s20, 1
      %s22 = scalar_select %p19, %s20, %s21
      %p25 = pneg %p19
      %p26 = scmp.eq.s32.totalorder %s10, 1
      %p27 = por %p25, %p26
      %p28 = scmp.ne.s32.totalorder %s20, %s23
      %p29 = scmp.eq.s32.totalorder %s10, 0
      %p30 = por %p28, %p29
      %p31 = scmp.ne.s32.totalorder %s20, %s23
      %p32 = scmp.eq.s32.totalorder %s15, 1
      %p33 = por %p31, %p32
      %p34 = scmp.ne.s32.totalorder %s23, %s24
      %p35 = scmp.eq.s32.totalorder %s15, 0
      %p36 = por %p34, %p35
      %p37 = scmp.ne.s32.totalorder %s23, %s24
      %p38 = scmp.eq.s32.totalorder %s16, 1
      %p39 = por %p37, %p38
      %p41 = scmp.ne.s32.totalorder %s24, %s40
      %p42 = scmp.eq.s32.totalorder %s16, 0
      %p43 = por %p41, %p42
      %s45 = sadd.s32 %s44, 1
      %p48 = scmp.eq.s32.totalorder %s10, 1
      %p49 = scmp.ne.s32.totalorder %s44, %s46
      %p50 = scmp.eq.s32.totalorder %s10, 0
      %p51 = por %p49, %p50
      %p52 = scmp.ne.s32.totalorder %s44, %s46
      %p53 = scmp.eq.s32.totalorder %s15, 1
      %p54 = por %p52, %p53
      %p55 = scmp.ne.s32.totalorder %s46, %s47
      %p56 = scmp.eq.s32.totalorder %s15, 0
      %p57 = por %p55, %p56
      %p58 = scmp.ne.s32.totalorder %s46, %s47
      %p59 = scmp.eq.s32.totalorder %s16, 1
      %p60 = por %p58, %p59
      %p62 = scmp.ne.s32.totalorder %s47, %s61
      %p63 = scmp.eq.s32.totalorder %s16, 0
      %p64 = por %p62, %p63
      %s66 = sadd.s32 %s65, 1
      %p69 = scmp.eq.s32.totalorder %s10, 1
      %p70 = scmp.ne.s32.totalorder %s65, %s67
      %p71 = scmp.eq.s32.totalorder %s10, 0
      %p72 = por %p70, %p71
      %p73 = scmp.ne.s32.totalorder %s65, %s67
      %p74 = scmp.eq.s32.totalorder %s15, 1
      %p75 = por %p73, %p74
      %p76 = scmp.ne.s32.totalorder %s67, %s68
      %p77 = scmp.eq.s32.totalorder %s15, 0
      %p78 = por %p76, %p77
      %p79 = scmp.ne.s32.totalorder %s67, %s68
      %p80 = scmp.eq.s32.totalorder %s16, 1
      %p81 = por %p79, %p80
      %p83 = scmp.ne.s32.totalorder %s68, %s82
      %p84 = scmp.eq.s32.totalorder %s16, 0
      %p85 = por %p83, %p84
      %s87 = sadd.s32 %s86, 1
      %p90 = scmp.eq.s32.totalorder %s10, 1
      %p91 = scmp.ne.s32.totalorder %s86, %s88
      %p92 = scmp.eq.s32.totalorder %s10, 0
      %p93 = por %p91, %p92
      %p94 = scmp.ne.s32.totalorder %s86, %s88
      %p95 = scmp.eq.s32.totalorder %s15, 1
      %p96 = por %p94, %p95
      %p97 = scmp.ne.s32.totalorder %s88, %s89
      %p98 = scmp.eq.s32.totalorder %s15, 0
      %p99 = por %p97, %p98
      %p100 = scmp.ne.s32.totalorder %s88, %s89
      %p101 = scmp.eq.s32.totalorder %s16, 1
      %p102 = por %p100, %p101
      %p104 = scmp.ne.s32.totalorder %s89, %s103
      %p105 = scmp.eq.s32.totalorder %s16, 0
      %p106 = por %p104, %p105
      %s107 = ssub.s32 %s10, %s17
      %p108 = scmp.eq.s32.totalorder %s107, 0
      %s110 = sadd.s32 %s109, 1
      %s111 = scalar_select %p108, %s109, %s110
      %p114 = pneg %p108
      %p115 = scmp.eq.s32.totalorder %s10, 1
      %p116 = por %p114, %p115
      %p117 = scmp.ne.s32.totalorder %s109, %s112
      %p118 = scmp.eq.s32.totalorder %s10, 0
      %p119 = por %p117, %p118
      %p120 = scmp.ne.s32.totalorder %s109, %s112
      %p121 = scmp.eq.s32.totalorder %s15, 1
      %p122 = por %p120, %p121
      %p123 = scmp.ne.s32.totalorder %s112, %s113
      %p124 = scmp.eq.s32.totalorder %s15, 0
      %p125 = por %p123, %p124
      %p126 = scmp.ne.s32.totalorder %s112, %s113
      %p127 = scmp.eq.s32.totalorder %s16, 1
      %p128 = por %p126, %p127
      %p130 = scmp.ne.s32.totalorder %s113, %s129
      %p131 = scmp.eq.s32.totalorder %s16, 0
      %p132 = por %p130, %p131
      %p133 = scmp.le.s32.totalorder 1, %s10
      %p134 = scmp.lt.s32.totalorder %s10, 3
      %p135 = pnand %p133, %p134
      %p136 = pneg %p135
      // Predicated region
      $region9: #{feature_attention_forward.1} parent=5 // pred_check
        _
      $region10: #{feature_attention_forward.1} parent=5 // pred_check_branch
        %138 = sbr.rel (%p135) target = $region12
      $region11: #{feature_attention_forward.1} parent=5 // pred_region
        %s139 = ssub.s32 %s10, 1
        // Predicated region
        $region13: #{feature_attention_forward.1} parent=11 // pred_check
          %p140 = pneg %p57
        $region14: #{feature_attention_forward.1} parent=11 // pred_check_branch
          %142 = sbr.rel (%p140) target = $region16
        $region15: #{feature_attention_forward.1} parent=11 // pred_region
          _
        $region16: #{feature_attention_forward.1} parent=11 // pred_fallthru
          _
        // Predicated region
        $region17: #{feature_attention_forward.1} parent=11 // pred_check
          %p143 = pneg %p78
        $region18: #{feature_attention_forward.1} parent=11 // pred_check_branch
          %145 = sbr.rel (%p143) target = $region20
        $region19: #{feature_attention_forward.1} parent=11 // pred_region
          _
        $region20: #{feature_attention_forward.1} parent=11 // pred_fallthru
          _
        // Predicated region
        $region21: #{feature_attention_forward.1} parent=11 // pred_check
          %p146 = pneg %p99
        $region22: #{feature_attention_forward.1} parent=11 // pred_check_branch
          %148 = sbr.rel (%p146) target = $region24
        $region23: #{feature_attention_forward.1} parent=11 // pred_region
          _
        $region24: #{feature_attention_forward.1} parent=11 // pred_fallthru
          _
      $region12: #{feature_attention_forward.1} parent=5 // pred_fallthru
        _
      %p149 = scmp.lt.s32.totalorder %s10, 2
      // Predicated region
      $region25: #{feature_attention_forward.1} parent=5 // pred_check
        %p150 = pneg %p149
      $region26: #{feature_attention_forward.1} parent=5 // pred_check_branch
        %152 = sbr.rel (%p150) target = $region28
      $region27: #{feature_attention_forward.1} parent=5 // pred_region
        // Predicated region
        $region29: #{feature_attention_forward.1} parent=27 // pred_check
          %p153 = pneg %p30
        $region30: #{feature_attention_forward.1} parent=27 // pred_check_branch
          %155 = sbr.rel (%p153) target = $region32
        $region31: #{feature_attention_forward.1} parent=27 // pred_region
          %p156 = scmp.lt.s32.totalorder %s10, 1
          %s157 = scalar_select %p156, %s10, 1
          %s158 = smul.addr %s157, 8
          %s159 = scalar_lea.vmem %s0, %s158
        $region32: #{feature_attention_forward.1} parent=27 // pred_fallthru
          _
      $region28: #{feature_attention_forward.1} parent=5 // pred_fallthru
        _
      %p160 = scmp.le.s32.totalorder 1, %s10
      %p161 = scmp.lt.s32.totalorder %s10, 3
      %p162 = pnand %p160, %p161
      %p163 = pneg %p162
      // Predicated region
      $region33: #{feature_attention_forward.1} parent=5 // pred_check
        _
      $region34: #{feature_attention_forward.1} parent=5 // pred_check_branch
        %165 = sbr.rel (%p162) target = $region36
      $region35: #{feature_attention_forward.1} parent=5 // pred_region
        %s166 = ssub.s32 %s10, 1
        %p167 = scmp.lt.s32.totalorder %s15, 1
        %s168 = scalar_select %p167, %s15, 1
        %s169 = smul.addr %s168, 8
        %s170 = scalar_lea.vmem %s0, %s169
        %p171 = pneg %p36
        %p172 = pneg %p33
        %p173 = pneg %p57
        %p174 = pneg %p54
        %p175 = pneg %p78
        %p176 = pneg %p75
        %p177 = pneg %p99
        %p178 = pneg %p96
        %p179 = pneg %p125
        %p180 = pneg %p122
        %s181 = sand.u32 %s112, 1
        %s182 = sand.u32 %s112, 1
        %s183 = smul.addr %s182, 16
        %s184 = scalar_lea.vmem [#allocation2], %s183
        %p185 = scmp.lt.s32.totalorder %s15, 1
        %s186 = scalar_select %p185, %s15, 1
        %s187 = smul.addr %s186, 8
        %s188 = scalar_lea.vmem %s0, %s187
        %v189 = vld [vmem:[%s188] sm:$0xff]
        %v190 = vld [vmem:[%s1] sm:$0xff]
        %v191 = vld [vmem:[%s1 + $0x8] sm:$0xff]
        %v192 = vld [vmem:[%s2] sm:$0xff]
        %v193 = vld [vmem:[%s2 + $0x8] sm:$0xff]
        %195 = vset.pattern.permute.xlu0 0
        %196 = vperm.xlu0 %195, %v192
        %v197 = vpop.permute.xlu0 %196
        %200 = vset.pattern.permute.xlu0 0
        %201 = vperm.xlu0 %200, %v193
        %v202 = vpop.permute.xlu0 %201
        %vm204 = vcmask 64512
        %v206 = vsel %vm204, %v190, 0
        %v209 = vsel %vm204, %v191, 0
        %211 = vmatprep.subr.mxu0 0.0
        %212 = vmatpush1.msra.mxu0 0.0
        %213 = vmatprep.subr.mxu0 0.0
        %214 = vmatpush1.msra.mxu0 0.0
        %215 = vmatprep.subr.mxu0 0.0
        %216 = vmatpush1.msra.mxu0 0.0
        %217 = vmatprep.subr.mxu0 0.0
        %218 = vmatpush1.msra.mxu0 0.0
        %219 = vmatprep.subr.mxu0 0.0
        %220 = vmatpush1.msra.mxu0 0.0
        %221 = vmatprep.subr.mxu0 0.0
        %222 = vmatpush1.msra.mxu0 0.0
        %223 = vmatprep.subr.mxu0 0.0
        %224 = vmatpush1.msra.mxu0 0.0
        %225 = vmatprep.subr.mxu0 0.0
        %226 = vmatpush1.msra.mxu0 0.0
        %227 = vmatprep.subr.mxu0 0.0
        %228 = vmatpush1.msra.mxu0 0.0
        %229 = vmatprep.subr.mxu0 0.0
        %230 = vmatpush1.msra.mxu0 0.0
        %231 = vmatprep.subr.mxu0 0.0
        %232 = vmatpush1.msra.mxu0 0.0
        %233 = vmatprep.subr.mxu0 0.0
        %234 = vmatpush1.msra.mxu0 0.0
        %235 = vmatprep.subr.mxu0 0.0
        %236 = vmatpush1.msra.mxu0 0.0
        %237 = vmatprep.subr.mxu0 0.0
        %238 = vmatpush1.msra.mxu0 0.0
        %239 = vmatprep.subr.mxu0 0.0
        %240 = vmatpush1.msra.mxu0 0.0
        %241 = vmatprep.subr.mxu0 0.0
        %242 = vmatpush1.msra.mxu0 %v189
        %243 = vmatprep.subr.mxu0 0.0
        %244 = vmatpush2.msra.mxu0 0.0
        %245 = vmatprep.subr.mxu0 0.0
        %246 = vmatpush2.msra.mxu0 0.0
        %247 = vmatprep.subr.mxu0 0.0
        %248 = vmatpush2.msra.mxu0 0.0
        %249 = vmatprep.subr.mxu0 0.0
        %250 = vmatpush2.msra.mxu0 0.0
        %251 = vmatprep.subr.mxu0 0.0
        %252 = vmatpush2.msra.mxu0 0.0
        %253 = vmatprep.subr.mxu0 0.0
        %254 = vmatpush2.msra.mxu0 0.0
        %255 = vmatprep.subr.mxu0 0.0
        %256 = vmatpush2.msra.mxu0 0.0
        %257 = vmatprep.subr.mxu0 0.0
        %258 = vmatpush2.msra.mxu0 0.0
        %259 = vmatprep.subr.mxu0 0.0
        %260 = vmatpush2.msra.mxu0 0.0
        %261 = vmatprep.subr.mxu0 0.0
        %262 = vmatpush2.msra.mxu0 0.0
        %263 = vmatprep.subr.mxu0 0.0
        %264 = vmatpush2.msra.mxu0 0.0
        %265 = vmatprep.subr.mxu0 0.0
        %266 = vmatpush2.msra.mxu0 0.0
        %267 = vmatprep.subr.mxu0 0.0
        %268 = vmatpush2.msra.mxu0 0.0
        %269 = vmatprep.subr.mxu0 0.0
        %270 = vmatpush2.msra.mxu0 0.0
        %271 = vmatprep.subr.mxu0 0.0
        %272 = vmatpush2.msra.mxu0 0.0
        %273 = vmatprep.subr.mxu0 0.0
        %274 = vmatpush2.msra.mxu0 0.0
        %275 = vmatprep.mubr.f32.mxu0 0.0
        %276 = vmatmul.mubr.f32.gmra.mxu0 %v206
        %v277 = vpop.f32.mrf.mxu0
        %v278 = vadd.f32 %v197, %v277
        %v279 = vpop.f32.mrf.mxu0
        %280 = vmatprep.mubr.f32.mxu0 0.0
        %281 = vmatmul.mubr.f32.gmra.mxu0 %v209
        %v282 = vpop.f32.mrf.mxu0
        %v283 = vadd.f32 %v202, %v282
        %v284 = vpop.f32.mrf.mxu0
        %285 = vdwg.mxu0
        %s286 = scalar_lea.vmem %s1, 16
        %v287 = vld [vmem:[%s286] sm:$0xff]
        %s288 = scalar_lea.vmem %s2, 16
        %v289 = vld [vmem:[%s288] sm:$0xff]
        %291 = vset.pattern.permute.xlu0 0
        %292 = vperm.xlu0 %291, %v289
        %v293 = vpop.permute.xlu0 %292
        %vm295 = vcmask 130048
        %v297 = vsel %vm295, %v287, 0
        %299 = vmatprep.subr.mxu0 0.0
        %300 = vmatpush1.msra.mxu0 0.0
        %301 = vmatprep.subr.mxu0 0.0
        %302 = vmatpush1.msra.mxu0 0.0
        %303 = vmatprep.subr.mxu0 0.0
        %304 = vmatpush1.msra.mxu0 0.0
        %305 = vmatprep.subr.mxu0 0.0
        %306 = vmatpush1.msra.mxu0 0.0
        %307 = vmatprep.subr.mxu0 0.0
        %308 = vmatpush1.msra.mxu0 0.0
        %309 = vmatprep.subr.mxu0 0.0
        %310 = vmatpush1.msra.mxu0 0.0
        %311 = vmatprep.subr.mxu0 0.0
        %312 = vmatpush1.msra.mxu0 0.0
        %313 = vmatprep.subr.mxu0 0.0
        %314 = vmatpush1.msra.mxu0 0.0
        %315 = vmatprep.subr.mxu0 0.0
        %316 = vmatpush1.msra.mxu0 0.0
        %317 = vmatprep.subr.mxu0 0.0
        %318 = vmatpush1.msra.mxu0 0.0
        %319 = vmatprep.subr.mxu0 0.0
        %320 = vmatpush1.msra.mxu0 0.0
        %321 = vmatprep.subr.mxu0 0.0
        %322 = vmatpush1.msra.mxu0 0.0
        %323 = vmatprep.subr.mxu0 0.0
        %324 = vmatpush1.msra.mxu0 0.0
        %325 = vmatprep.subr.mxu0 0.0
        %326 = vmatpush1.msra.mxu0 0.0
        %327 = vmatprep.subr.mxu0 0.0
        %328 = vmatpush1.msra.mxu0 %v283
        %329 = vmatprep.subr.mxu0 0.0
        %330 = vmatpush1.msra.mxu0 %v278
        %331 = vmatprep.subr.mxu0 0.0
        %332 = vmatpush2.msra.mxu0 0.0
        %333 = vmatprep.subr.mxu0 0.0
        %334 = vmatpush2.msra.mxu0 0.0
        %335 = vmatprep.subr.mxu0 0.0
        %336 = vmatpush2.msra.mxu0 0.0
        %337 = vmatprep.subr.mxu0 0.0
        %338 = vmatpush2.msra.mxu0 0.0
        %339 = vmatprep.subr.mxu0 0.0
        %340 = vmatpush2.msra.mxu0 0.0
        %341 = vmatprep.subr.mxu0 0.0
        %342 = vmatpush2.msra.mxu0 0.0
        %343 = vmatprep.subr.mxu0 0.0
        %344 = vmatpush2.msra.mxu0 0.0
        %345 = vmatprep.subr.mxu0 0.0
        %346 = vmatpush2.msra.mxu0 0.0
        %347 = vmatprep.subr.mxu0 0.0
        %348 = vmatpush2.msra.mxu0 0.0
        %349 = vmatprep.subr.mxu0 0.0
        %350 = vmatpush2.msra.mxu0 0.0
        %351 = vmatprep.subr.mxu0 0.0
        %352 = vmatpush2.msra.mxu0 0.0
        %353 = vmatprep.subr.mxu0 0.0
        %354 = vmatpush2.msra.mxu0 0.0
        %355 = vmatprep.subr.mxu0 0.0
        %356 = vmatpush2.msra.mxu0 0.0
        %357 = vmatprep.subr.mxu0 0.0
        %358 = vmatpush2.msra.mxu0 0.0
        %359 = vmatprep.subr.mxu0 0.0
        %360 = vmatpush2.msra.mxu0 0.0
        %361 = vmatprep.subr.mxu0 0.0
        %362 = vmatpush2.msra.mxu0 0.0
        %363 = vmatprep.mubr.f32.mxu0 0.0
        %364 = vmatmul.mubr.f32.gmra.mxu0 %v297
        %v365 = vpop.f32.mrf.mxu0
        %v366 = vadd.f32 %v293, %v365
        %v367 = vpop.f32.mrf.mxu0
        %368 = vdwg.mxu0
        %v369 = vmax.f32 %v366, 0.0
        %s370 = scalar_lea.vmem %s1, 32
        %v371 = vld [vmem:[%s370] sm:$0xff]
        %v372 = vld [vmem:[%s370 + $0x8] sm:$0xff]
        %s373 = scalar_lea.vmem %s2, 32
        %v374 = vld [vmem:[%s373] sm:$0xff]
        %v375 = vld [vmem:[%s373 + $0x8] sm:$0xff]
        %377 = vset.pattern.permute.xlu0 0
        %378 = vperm.xlu0 %377, %v374
        %v379 = vpop.permute.xlu0 %378
        %382 = vset.pattern.permute.xlu0 0
        %383 = vperm.xlu0 %382, %v375
        %v384 = vpop.permute.xlu0 %383
        %v387 = vsel %vm204, %v371, 0
        %v390 = vsel %vm204, %v372, 0
        %392 = vmatprep.subr.mxu0 0.0
        %393 = vmatpush1.msra.mxu0 0.0
        %394 = vmatprep.subr.mxu0 0.0
        %395 = vmatpush1.msra.mxu0 0.0
        %396 = vmatprep.subr.mxu0 0.0
        %397 = vmatpush1.msra.mxu0 0.0
        %398 = vmatprep.subr.mxu0 0.0
        %399 = vmatpush1.msra.mxu0 0.0
        %400 = vmatprep.subr.mxu0 0.0
        %401 = vmatpush1.msra.mxu0 0.0
        %402 = vmatprep.subr.mxu0 0.0
        %403 = vmatpush1.msra.mxu0 0.0
        %404 = vmatprep.subr.mxu0 0.0
        %405 = vmatpush1.msra.mxu0 0.0
        %406 = vmatprep.subr.mxu0 0.0
        %407 = vmatpush1.msra.mxu0 0.0
        %408 = vmatprep.subr.mxu0 0.0
        %409 = vmatpush1.msra.mxu0 0.0
        %410 = vmatprep.subr.mxu0 0.0
        %411 = vmatpush1.msra.mxu0 0.0
        %412 = vmatprep.subr.mxu0 0.0
        %413 = vmatpush1.msra.mxu0 0.0
        %414 = vmatprep.subr.mxu0 0.0
        %415 = vmatpush1.msra.mxu0 0.0
        %416 = vmatprep.subr.mxu0 0.0
        %417 = vmatpush1.msra.mxu0 0.0
        %418 = vmatprep.subr.mxu0 0.0
        %419 = vmatpush1.msra.mxu0 0.0
        %420 = vmatprep.subr.mxu0 0.0
        %421 = vmatpush1.msra.mxu0 0.0
        %422 = vmatprep.subr.mxu0 0.0
        %423 = vmatpush1.msra.mxu0 %v369
        %424 = vmatprep.subr.mxu0 0.0
        %425 = vmatpush2.msra.mxu0 0.0
        %426 = vmatprep.subr.mxu0 0.0
        %427 = vmatpush2.msra.mxu0 0.0
        %428 = vmatprep.subr.mxu0 0.0
        %429 = vmatpush2.msra.mxu0 0.0
        %430 = vmatprep.subr.mxu0 0.0
        %431 = vmatpush2.msra.mxu0 0.0
        %432 = vmatprep.subr.mxu0 0.0
        %433 = vmatpush2.msra.mxu0 0.0
        %434 = vmatprep.subr.mxu0 0.0
        %435 = vmatpush2.msra.mxu0 0.0
        %436 = vmatprep.subr.mxu0 0.0
        %437 = vmatpush2.msra.mxu0 0.0
        %438 = vmatprep.subr.mxu0 0.0
        %439 = vmatpush2.msra.mxu0 0.0
        %440 = vmatprep.subr.mxu0 0.0
        %441 = vmatpush2.msra.mxu0 0.0
        %442 = vmatprep.subr.mxu0 0.0
        %443 = vmatpush2.msra.mxu0 0.0
        %444 = vmatprep.subr.mxu0 0.0
        %445 = vmatpush2.msra.mxu0 0.0
        %446 = vmatprep.subr.mxu0 0.0
        %447 = vmatpush2.msra.mxu0 0.0
        %448 = vmatprep.subr.mxu0 0.0
        %449 = vmatpush2.msra.mxu0 0.0
        %450 = vmatprep.subr.mxu0 0.0
        %451 = vmatpush2.msra.mxu0 0.0
        %452 = vmatprep.subr.mxu0 0.0
        %453 = vmatpush2.msra.mxu0 0.0
        %454 = vmatprep.subr.mxu0 0.0
        %455 = vmatpush2.msra.mxu0 0.0
        %456 = vmatprep.mubr.f32.mxu0 0.0
        %457 = vmatmul.mubr.f32.gmra.mxu0 %v387
        %v458 = vpop.f32.mrf.mxu0
        %v459 = vadd.f32 %v379, %v458
        %v460 = vpop.f32.mrf.mxu0
        %461 = vmatprep.mubr.f32.mxu0 0.0
        %462 = vmatmul.mubr.f32.gmra.mxu0 %v390
        %v463 = vpop.f32.mrf.mxu0
        %v464 = vadd.f32 %v384, %v463
        %v465 = vpop.f32.mrf.mxu0
        %466 = vdwg.mxu0
        %v467 = vmul.f32 %v278, %v459
        %v468 = vmul.f32 %v283, %v464
        %v469 = vld [vmem:[%s3] sm:$0x1]
        %v470 = vld [vmem:[%s3 + $0x1] sm:$0x1]
        %v471 = vld [vmem:[%s3 + $0x2] sm:$0x1]
        %v472 = vld [vmem:[%s3 + $0x3] sm:$0x1]
        %s473 = scalar_lea.vmem %s1, 48
        %v474 = vld [vmem:[%s473] sm:$0xff]
        %475 = vrot.lane.b32.xlu0 %v467, 16
        %v476 = vpop.permute.xlu0 %475
        %477 = vrot.lane.b32.xlu0 %v468, 16
        %v478 = vpop.permute.xlu0 %477
        %v479 = vlaneseq
        %v480 = vshrl.u32 %v479, 7
        %v481 = vsub.s32 0, %v480
        %v482 = vrot.slane %v469, %v481
        %v483 = vmul.f32 %v476, %v482
        %v484 = vmul.f32 %v478, %v482
        %485 = vrot.lane.b32.xlu0 %v467, 8
        %v486 = vpop.permute.xlu0 %485
        %487 = vrot.lane.b32.xlu0 %v468, 8
        %v488 = vpop.permute.xlu0 %487
        %v489 = vlaneseq
        %v490 = vshrl.u32 %v489, 7
        %v491 = vsub.s32 0, %v490
        %v492 = vrot.slane %v470, %v491
        %v493 = vmul.f32 %v486, %v492
        %v494 = vmul.f32 %v488, %v492
        %495 = vrot.lane.b32.xlu0 %v467, 120
        %v496 = vpop.permute.xlu0 %495
        %497 = vrot.lane.b32.xlu0 %v468, 120
        %v498 = vpop.permute.xlu0 %497
        %v499 = vlaneseq
        %v500 = vshrl.u32 %v499, 7
        %v501 = vsub.s32 0, %v500
        %v502 = vrot.slane %v471, %v501
        %v503 = vmul.f32 %v496, %v502
        %v504 = vmul.f32 %v498, %v502
        %505 = vrot.lane.b32.xlu0 %v467, 112
        %v506 = vpop.permute.xlu0 %505
        %507 = vrot.lane.b32.xlu0 %v468, 112
        %v508 = vpop.permute.xlu0 %507
        %v509 = vlaneseq
        %v510 = vshrl.u32 %v509, 7
        %v511 = vsub.s32 0, %v510
        %v512 = vrot.slane %v472, %v511
        %v513 = vmul.f32 %v506, %v512
        %v514 = vmul.f32 %v508, %v512
        %s515 = scalar_lea.vmem %s2, 48
        %v516 = vld [vmem:[%s515] sm:$0xff]
        %518 = vset.pattern.permute.xlu0 0
        %519 = vperm.xlu0 %518, %v516
        %v520 = vpop.permute.xlu0 %519
        %vm522 = vcmask 654336
        %v524 = vsel %vm522, %v474, 0
        %526 = vmatprep.subr.mxu0 0.0
        %527 = vmatpush1.msra.mxu0 0.0
        %528 = vmatprep.subr.mxu0 0.0
        %529 = vmatpush1.msra.mxu0 0.0
        %530 = vmatprep.subr.mxu0 0.0
        %531 = vmatpush1.msra.mxu0 0.0
        %532 = vmatprep.subr.mxu0 0.0
        %533 = vmatpush1.msra.mxu0 0.0
        %534 = vmatprep.subr.mxu0 0.0
        %535 = vmatpush1.msra.mxu0 0.0
        %536 = vmatprep.subr.mxu0 0.0
        %537 = vmatpush1.msra.mxu0 0.0
        %538 = vmatprep.subr.mxu0 0.0
        %539 = vmatpush1.msra.mxu0 %v514
        %540 = vmatprep.subr.mxu0 0.0
        %541 = vmatpush1.msra.mxu0 %v513
        %542 = vmatprep.subr.mxu0 0.0
        %543 = vmatpush1.msra.mxu0 %v504
        %544 = vmatprep.subr.mxu0 0.0
        %545 = vmatpush1.msra.mxu0 %v503
        %546 = vmatprep.subr.mxu0 0.0
        %547 = vmatpush1.msra.mxu0 %v468
        %548 = vmatprep.subr.mxu0 0.0
        %549 = vmatpush1.msra.mxu0 %v467
        %550 = vmatprep.subr.mxu0 0.0
        %551 = vmatpush1.msra.mxu0 %v494
        %552 = vmatprep.subr.mxu0 0.0
        %553 = vmatpush1.msra.mxu0 %v493
        %554 = vmatprep.subr.mxu0 0.0
        %555 = vmatpush1.msra.mxu0 %v484
        %556 = vmatprep.subr.mxu0 0.0
        %557 = vmatpush1.msra.mxu0 %v483
        %558 = vmatprep.subr.mxu0 0.0
        %559 = vmatpush2.msra.mxu0 0.0
        %560 = vmatprep.subr.mxu0 0.0
        %561 = vmatpush2.msra.mxu0 0.0
        %562 = vmatprep.subr.mxu0 0.0
        %563 = vmatpush2.msra.mxu0 0.0
        %564 = vmatprep.subr.mxu0 0.0
        %565 = vmatpush2.msra.mxu0 0.0
        %566 = vmatprep.subr.mxu0 0.0
        %567 = vmatpush2.msra.mxu0 0.0
        %568 = vmatprep.subr.mxu0 0.0
        %569 = vmatpush2.msra.mxu0 0.0
        %570 = vmatprep.subr.mxu0 0.0
        %571 = vmatpush2.msra.mxu0 0.0
        %572 = vmatprep.subr.mxu0 0.0
        %573 = vmatpush2.msra.mxu0 0.0
        %574 = vmatprep.subr.mxu0 0.0
        %575 = vmatpush2.msra.mxu0 0.0
        %576 = vmatprep.subr.mxu0 0.0
        %577 = vmatpush2.msra.mxu0 0.0
        %578 = vmatprep.subr.mxu0 0.0
        %579 = vmatpush2.msra.mxu0 0.0
        %580 = vmatprep.subr.mxu0 0.0
        %581 = vmatpush2.msra.mxu0 0.0
        %582 = vmatprep.subr.mxu0 0.0
        %583 = vmatpush2.msra.mxu0 0.0
        %584 = vmatprep.subr.mxu0 0.0
        %585 = vmatpush2.msra.mxu0 0.0
        %586 = vmatprep.subr.mxu0 0.0
        %587 = vmatpush2.msra.mxu0 0.0
        %588 = vmatprep.subr.mxu0 0.0
        %589 = vmatpush2.msra.mxu0 0.0
        %590 = vmatprep.mubr.f32.mxu0 0.0
        %591 = vmatmul.mubr.f32.gmra.mxu0 %v524
        %v592 = vpop.f32.mrf.mxu0
        %v593 = vadd.f32 %v520, %v592
        %v594 = vpop.f32.mrf.mxu0
        %595 = vdwg.mxu0
        %v596 = vmax.f32 %v593, 0.0
        %s597 = scalar_lea.vmem %s1, 64
        %v598 = vld [vmem:[%s597] sm:$0xff]
        %v599 = vld [vmem:[%s597 + $0x8] sm:$0xff]
        %600 = vrot.lane.b32.xlu0 %v596, 16
        %v601 = vpop.permute.xlu0 %600
        %v602 = vmul.f32 %v601, %v482
        %603 = vrot.lane.b32.xlu0 %v596, 8
        %v604 = vpop.permute.xlu0 %603
        %v605 = vmul.f32 %v604, %v492
        %606 = vrot.lane.b32.xlu0 %v596, 120
        %v607 = vpop.permute.xlu0 %606
        %v608 = vmul.f32 %v607, %v502
        %609 = vrot.lane.b32.xlu0 %v596, 112
        %v610 = vpop.permute.xlu0 %609
        %v611 = vmul.f32 %v610, %v512
        %s612 = scalar_lea.vmem %s2, 64
        %v613 = vld [vmem:[%s612] sm:$0xff]
        %v614 = vld [vmem:[%s612 + $0x8] sm:$0xff]
        %616 = vset.pattern.permute.xlu0 0
        %617 = vperm.xlu0 %616, %v613
        %v618 = vpop.permute.xlu0 %617
        %621 = vset.pattern.permute.xlu0 0
        %622 = vperm.xlu0 %621, %v614
        %v623 = vpop.permute.xlu0 %622
        %vm625 = vcmask 326656
        %v627 = vsel %vm625, %v598, 0
        %v630 = vsel %vm625, %v599, 0
        %632 = vmatprep.subr.mxu0 0.0
        %633 = vmatpush1.msra.mxu0 0.0
        %634 = vmatprep.subr.mxu0 0.0
        %635 = vmatpush1.msra.mxu0 0.0
        %636 = vmatprep.subr.mxu0 0.0
        %637 = vmatpush1.msra.mxu0 0.0
        %638 = vmatprep.subr.mxu0 0.0
        %639 = vmatpush1.msra.mxu0 0.0
        %640 = vmatprep.subr.mxu0 0.0
        %641 = vmatpush1.msra.mxu0 0.0
        %642 = vmatprep.subr.mxu0 0.0
        %643 = vmatpush1.msra.mxu0 0.0
        %644 = vmatprep.subr.mxu0 0.0
        %645 = vmatpush1.msra.mxu0 0.0
        %646 = vmatprep.subr.mxu0 0.0
        %647 = vmatpush1.msra.mxu0 0.0
        %648 = vmatprep.subr.mxu0 0.0
        %649 = vmatpush1.msra.mxu0 0.0
        %650 = vmatprep.subr.mxu0 0.0
        %651 = vmatpush1.msra.mxu0 0.0
        %652 = vmatprep.subr.mxu0 0.0
        %653 = vmatpush1.msra.mxu0 0.0
        %654 = vmatprep.subr.mxu0 0.0
        %655 = vmatpush1.msra.mxu0 %v611
        %656 = vmatprep.subr.mxu0 0.0
        %657 = vmatpush1.msra.mxu0 %v608
        %658 = vmatprep.subr.mxu0 0.0
        %659 = vmatpush1.msra.mxu0 %v596
        %660 = vmatprep.subr.mxu0 0.0
        %661 = vmatpush1.msra.mxu0 %v605
        %662 = vmatprep.subr.mxu0 0.0
        %663 = vmatpush1.msra.mxu0 %v602
        %664 = vmatprep.subr.mxu0 0.0
        %665 = vmatpush2.msra.mxu0 0.0
        %666 = vmatprep.subr.mxu0 0.0
        %667 = vmatpush2.msra.mxu0 0.0
        %668 = vmatprep.subr.mxu0 0.0
        %669 = vmatpush2.msra.mxu0 0.0
        %670 = vmatprep.subr.mxu0 0.0
        %671 = vmatpush2.msra.mxu0 0.0
        %672 = vmatprep.subr.mxu0 0.0
        %673 = vmatpush2.msra.mxu0 0.0
        %674 = vmatprep.subr.mxu0 0.0
        %675 = vmatpush2.msra.mxu0 0.0
        %676 = vmatprep.subr.mxu0 0.0
        %677 = vmatpush2.msra.mxu0 0.0
        %678 = vmatprep.subr.mxu0 0.0
        %679 = vmatpush2.msra.mxu0 0.0
        %680 = vmatprep.subr.mxu0 0.0
        %681 = vmatpush2.msra.mxu0 0.0
        %682 = vmatprep.subr.mxu0 0.0
        %683 = vmatpush2.msra.mxu0 0.0
        %684 = vmatprep.subr.mxu0 0.0
        %685 = vmatpush2.msra.mxu0 0.0
        %686 = vmatprep.subr.mxu0 0.0
        %687 = vmatpush2.msra.mxu0 0.0
        %688 = vmatprep.subr.mxu0 0.0
        %689 = vmatpush2.msra.mxu0 0.0
        %690 = vmatprep.subr.mxu0 0.0
        %691 = vmatpush2.msra.mxu0 0.0
        %692 = vmatprep.subr.mxu0 0.0
        %693 = vmatpush2.msra.mxu0 0.0
        %694 = vmatprep.subr.mxu0 0.0
        %695 = vmatpush2.msra.mxu0 0.0
        %696 = vmatprep.mubr.f32.mxu0 0.0
        %697 = vmatmul.mubr.f32.gmra.mxu0 %v627
        %v698 = vpop.f32.mrf.mxu0
        %v699 = vadd.f32 %v618, %v698
        %v700 = vpop.f32.mrf.mxu0
        %701 = vmatprep.mubr.f32.mxu0 0.0
        %702 = vmatmul.mubr.f32.gmra.mxu0 %v630
        %v703 = vpop.f32.mrf.mxu0
        %v704 = vadd.f32 %v623, %v703
        %v705 = vpop.f32.mrf.mxu0
        %706 = vdwg.mxu0
        %v707 = vmul.f32 %v699, 0.5
        %v708 = vmul.f32 %v704, 0.5
        %v709 = vtanh.pop %v707
        %v710 = vtanh.pop %v708
        %v711 = vmul.f32 %v709, 0.5
        %v712 = vmul.f32 %v710, 0.5
        %v713 = vadd.f32 %v711, 0.5
        %v714 = vadd.f32 %v712, 0.5
        %v715 = vmul.f32 %v467, %v713
        %v716 = vmul.f32 %v468, %v714
        %717 = vst [vmem:[%s184] sm:$0xff] %v715
        %718 = vst [vmem:[%s184 + $0x8] sm:$0xff] %v716
        %s719 = sand.u32 %s112, 1
        %s720 = sand.u32 %s112, 1
        %s721 = smul.addr %s720, 16
        %s722 = scalar_lea.vmem [#allocation2], %s721
        // Predicated region
        $region37: #{feature_attention_forward.1} parent=35 // pred_check
          %p723 = pneg %p122
        $region38: #{feature_attention_forward.1} parent=35 // pred_check_branch
          %725 = sbr.rel (%p723) target = $region40
        $region39: #{feature_attention_forward.1} parent=35 // pred_region
          %s726 = smul.addr %s15, 8
          %s727 = scalar_lea.vmem %s4, %s726
          // Predicated region
          $region41: #{feature_attention_forward.1} parent=39 // pred_check
            _
          $region42: #{feature_attention_forward.1} parent=39 // pred_check_branch
            %729 = sbr.rel (0) target = $region44
          $region43: #{feature_attention_forward.1} parent=39 // pred_region
            // Predicated region
            $region45: #{feature_attention_forward.1} parent=43 // pred_check
              _
            $region46: #{feature_attention_forward.1} parent=43 // pred_check_branch
              %731 = sbr.rel (0) target = $region48
            $region47: #{feature_attention_forward.1} parent=43 // pred_region
              // Predicated region
              $region60: #{feature_attention_forward.1} parent=47 // pred_check
                _
              $region61: #{feature_attention_forward.1} parent=47 // pred_check_branch
                %749 = sbr.rel (0) target = $region63
              $region62: #{feature_attention_forward.1} parent=47 // pred_region
                loop: start=0, step=1, limit=1
                $region64: #{feature_attention_forward.1} parent=62 // loop_pre_header
                  _
                $region65: #{feature_attention_forward.1} parent=62 // loop_header
                  %s751 = sphi 0, %s755
                  %p752 = scmp.ge.s32.totalorder %s751, 1
                  %s756 = sphi %s722, %s722
                  %s757 = sphi %s727, %s727
                $region66: #{feature_attention_forward.1} parent=62 // loop_header_branch
                  %754 = sbr.rel (%p752) target = $region70
                $region67: #{feature_attention_forward.1} parent=62 // loop_body
                  %v758 = vld [vmem:[%s756] sm:$0xff]
                  %759 = vst [vmem:[%s757] sm:$0xff] %v758
                  %v760 = vld [vmem:[%s756 + $0x8] sm:$0xff]
                  %761 = vst [vmem:[%s757 + $0x10] sm:$0xff] %v760
                $region68: #{feature_attention_forward.1} parent=62 // loop_footer
                  %s755 = sadd.s32 1, %s751
                $region69: #{feature_attention_forward.1} parent=62 // loop_footer_branch
                  %750 = sbr.rel target = $region65
                $region70: #{feature_attention_forward.1} parent=62 // loop_exit
                  _
              $region63: #{feature_attention_forward.1} parent=47 // pred_fallthru
                _
              // Predicated region
              $region71: #{feature_attention_forward.1} parent=47 // pred_check
                _
              $region72: #{feature_attention_forward.1} parent=47 // pred_check_branch
                %763 = sbr.rel target = $region74
              $region73: #{feature_attention_forward.1} parent=47 // pred_region
                _
              $region74: #{feature_attention_forward.1} parent=47 // pred_fallthru
                _
            $region48: #{feature_attention_forward.1} parent=43 // pred_fallthru
              _
            // Predicated region
            $region49: #{feature_attention_forward.1} parent=43 // pred_check
              _
            $region50: #{feature_attention_forward.1} parent=43 // pred_check_branch
              %733 = sbr.rel target = $region52
            $region51: #{feature_attention_forward.1} parent=43 // pred_region
              %s735 = ssub.s32 256, 1
              loop: start=0, step=1, limit=1
              $region53: #{feature_attention_forward.1} parent=51 // loop_pre_header
                _
              $region54: #{feature_attention_forward.1} parent=51 // loop_header
                %s737 = sphi 0, %s741
                %p738 = scmp.ge.s32.totalorder %s737, 1
                %s742 = sphi %s722, %s722
                %s743 = sphi %s727, %s727
              $region55: #{feature_attention_forward.1} parent=51 // loop_header_branch
                %740 = sbr.rel (%p738) target = $region59
              $region56: #{feature_attention_forward.1} parent=51 // loop_body
                %v744 = vld [vmem:[%s742] sm:%s735]
                %745 = vst [vmem:[%s743] sm:%s735] %v744
                %v746 = vld [vmem:[%s742 + $0x8] sm:%s735]
                %747 = vst [vmem:[%s743 + $0x10] sm:%s735] %v746
              $region57: #{feature_attention_forward.1} parent=51 // loop_footer
                %s741 = sadd.s32 1, %s737
              $region58: #{feature_attention_forward.1} parent=51 // loop_footer_branch
                %736 = sbr.rel target = $region54
              $region59: #{feature_attention_forward.1} parent=51 // loop_exit
                _
            $region52: #{feature_attention_forward.1} parent=43 // pred_fallthru
              _
          $region44: #{feature_attention_forward.1} parent=39 // pred_fallthru
            _
          %764 = vnop
        $region40: #{feature_attention_forward.1} parent=35 // pred_fallthru
          _
      $region36: #{feature_attention_forward.1} parent=5 // pred_fallthru
        _
      %p765 = scmp.le.s32.totalorder 2, %s10
      // Predicated region
      $region75: #{feature_attention_forward.1} parent=5 // pred_check
        %p766 = pneg %p765
      $region76: #{feature_attention_forward.1} parent=5 // pred_check_branch
        %768 = sbr.rel (%p766) target = $region78
      $region77: #{feature_attention_forward.1} parent=5 // pred_region
        %s769 = ssub.s32 %s10, 2
        // Predicated region
        $region79: #{feature_attention_forward.1} parent=77 // pred_check
          %p770 = pneg %p128
        $region80: #{feature_attention_forward.1} parent=77 // pred_check_branch
          %772 = sbr.rel (%p770) target = $region82
        $region81: #{feature_attention_forward.1} parent=77 // pred_region
          %s773 = sand.u32 %s113, 1
          %s774 = sand.u32 %s113, 1
          %s775 = smul.addr %s774, 16
          %s776 = scalar_lea.vmem [#allocation2], %s775
        $region82: #{feature_attention_forward.1} parent=77 // pred_fallthru
          _
      $region78: #{feature_attention_forward.1} parent=5 // pred_fallthru
        _
    $region6: #{feature_attention_forward.1} parent=1 // loop_footer
      %s14 = sadd.s32 1, %s10
    $region7: #{feature_attention_forward.1} parent=1 // loop_footer_branch
      %9 = sbr.rel target = $region3
    $region8: #{feature_attention_forward.1} parent=1 // loop_exit
      _

</llo_original>
